<compile_context>
chip_gen: v7x
topology: tpu7x:2x2x1
jax: 0.10.0
libtpu: 0.0.40
codegen_flags: <defaults>
</compile_context>

<pallas_src>
import functools
import math

import jax
import jax.numpy as jnp
from jax.experimental import pallas as pl
from jax.experimental.pallas import tpu as pltpu


def _bilinear_matrix(out_size: int, in_size: int):
    """Separable bilinear interpolation matrix, PyTorch align_corners=False
    (half-pixel centers) convention. Always float32."""
    i = jnp.arange(out_size, dtype=jnp.float32)
    scale = in_size / out_size
    src = (i + 0.5) * scale - 0.5
    src = jnp.clip(src, 0.0, float(in_size - 1))
    i0 = jnp.floor(src).astype(jnp.int32)
    i1 = jnp.minimum(i0 + 1, in_size - 1)
    frac = src - i0.astype(jnp.float32)
    w = jnp.zeros((out_size, in_size), dtype=jnp.float32)
    rows = jnp.arange(out_size)
    w = w.at[rows, i0].add(1.0 - frac)
    w = w.at[rows, i1].add(frac)
    return w


def _interp_kernel(wh_ref, wwt_ref, x_ref, o_ref, tmp_ref, *, tb, h_in, h_out):
    # x_ref:   (tb * h_in,  W_in)   tb input planes stacked along sublanes
    # tmp_ref: (tb * h_out, W_in)   f32 scratch: height-interpolated planes
    # o_ref:   (tb * h_out, W_out)  final slab for this grid step
    wh = wh_ref[...]                                      # (h_out, h_in) f32, hoisted
    # Height pass: tb small MXU matmuls (static unroll, tb kept small).
    for b in range(tb):
        xb = x_ref[pl.ds(b * h_in, h_in), :].astype(jnp.float32)     # (h_in, W_in)
        tmp_ref[pl.ds(b * h_out, h_out), :] = jnp.dot(
            wh, xb, preferred_element_type=jnp.float32)              # (h_out, W_in)
    # Width pass: one big matmul with pre-transposed Ww; single contiguous store.
    o_ref[...] = jnp.dot(tmp_ref[...], wwt_ref[...],
                         preferred_element_type=jnp.float32).astype(o_ref.dtype)


def _choose_tb(nc, h_in, w_in, h_out, w_out, itemsize, max_tb=32,
               vmem_budget=24 * 1024 * 1024):
    """Largest plane-batch TB that divides nc, fits the VMEM budget (double-buffered
    in/out blocks + f32 scratch + weights), keeps block sublane counts 8-aligned,
    and leaves >= 2 grid steps when possible (v7x has 2 TensorCores/chip)."""
    def fits(tb):
        blk = 2 * tb * h_in * w_in * itemsize            # input block, double-buffered
        blk += 2 * tb * h_out * w_out * itemsize         # output block, double-buffered
        blk += tb * h_out * w_in * 4                     # f32 scratch
        blk += (h_out * h_in + w_in * w_out) * 4         # weight matrices
        return blk <= vmem_budget

    cands = []
    for tb in range(1, min(nc, max_tb) + 1):
        if nc % tb:
            continue
        if not fits(tb):
            continue
        if tb != nc and ((tb * h_in) % 8 or (tb * h_out) % 8):
            continue
        cands.append(tb)
    if not cands:
        return nc if nc <= max_tb else 1
    multi_step = [tb for tb in cands if nc // tb >= 2]
    return max(multi_step) if multi_step else max(cands)


def interpolate_bilinear(x, size=None, scale_factor=None):
    """Equivalent of Interpolate(size=..., mode='bilinear', scale_factor=...)(x),
    for NCHW inputs."""
    # TODO(synk): only mode='bilinear' (the module's default) is implemented here.
    N, C, H, W = x.shape
    if size is not None:
        Ho, Wo = (size, size) if isinstance(size, int) else tuple(size)
    else:
        Ho = int(math.floor(H * scale_factor))
        Wo = int(math.floor(W * scale_factor))

    wh = _bilinear_matrix(Ho, H)                 # (Ho, H)  f32
    wwt = _bilinear_matrix(Wo, W).T              # (W, Wo)  f32, pre-transposed (host)

    nc = N * C
    tb = _choose_tb(nc, H, W, Ho, Wo, x.dtype.itemsize)
    grid = nc // tb

    xf = x.reshape(nc * H, W)                    # contiguous => free reshape

    kernel = functools.partial(_interp_kernel, tb=tb, h_in=H, h_out=Ho)

    out2d = pl.pallas_call(
        kernel,
        out_shape=jax.ShapeDtypeStruct((nc * Ho, Wo), x.dtype),
        grid=(grid,),
        in_specs=[
            pl.BlockSpec((Ho, H), lambda i: (0, 0)),        # Wh, resident across steps
            pl.BlockSpec((W, Wo), lambda i: (0, 0)),        # Ww^T, resident across steps
            pl.BlockSpec((tb * H, W), lambda i: (i, 0)),    # tb input planes per step
        ],
        out_specs=pl.BlockSpec((tb * Ho, Wo), lambda i: (i, 0)),
        scratch_shapes=[pltpu.VMEM((tb * Ho, W), jnp.float32)],
        compiler_params=pltpu.CompilerParams(
            dimension_semantics=("parallel",),
            vmem_limit_bytes=48 * 1024 * 1024),
    )(wh, wwt, xf)

    return out2d.reshape(N, C, Ho, Wo)


if __name__ == "__main__":
    key = jax.random.PRNGKey(0)
    # Small NCHW feature map, as the module's forward implies.
    N, C, H, W = 2, 4, 16, 16
    scale = 2
    x = jax.random.normal(key, (N, C, H, W), dtype=jnp.float32)

    y = interpolate_bilinear(x, scale_factor=scale)
    y = jax.block_until_ready(y)

    # Reference (plain JAX) using the same separable-bilinear formulation.
    wh = _bilinear_matrix(H * scale, H)
    wwt = _bilinear_matrix(W * scale, W).T
    ref = jnp.einsum("oh,nchw,wp->ncop", wh, x, wwt).astype(x.dtype)

    assert y.shape == (N, C, H * scale, W * scale), y.shape
    assert jnp.allclose(y, ref, atol=1e-5, rtol=1e-5), float(jnp.max(jnp.abs(y - ref)))
    print("KERNEL_OK")
</pallas_src>

<mosaic_0001>
module attributes {stable_mosaic.version = 11 : i64} {
  func.func @_interp_kernel(%arg0: i32, %arg1: memref<32x16xf32, #tpu.memory_space<vmem>>, %arg2: memref<16x32xf32, #tpu.memory_space<vmem>>, %arg3: memref<64x16xf32, #tpu.memory_space<vmem>>, %arg4: memref<128x32xf32, #tpu.memory_space<vmem>>, %arg5: memref<128x16xf32, #tpu.memory_space<vmem>>) attributes {dimension_semantics = [#tpu.dimension_semantics<parallel>], iteration_bounds = array<i64: 2>, scalar_prefetch = 0 : i64, scratch_operands = 1 : i64, tpu.core_type = #tpu.core_type<tc>, window_params = [{pipeline_mode = #tpu.pipeline_mode<synchronous>, transform_indices = @transform_0, window_bounds = array<i64: 32, 16>}, {pipeline_mode = #tpu.pipeline_mode<synchronous>, transform_indices = @transform_1, window_bounds = array<i64: 16, 32>}, {transform_indices = @transform_2, window_bounds = array<i64: 64, 16>}, {transform_indices = @transform_3, window_bounds = array<i64: 128, 32>}]} {
    %c0 = arith.constant 0 : index
    %c0_0 = arith.constant 0 : index
    %0 = vector.load %arg1[%c0, %c0_0] : memref<32x16xf32, #tpu.memory_space<vmem>>, vector<32x16xf32>
    %c0_1 = arith.constant 0 : index
    %c0_2 = arith.constant 0 : index
    %1 = vector.load %arg3[%c0_1, %c0_2] : memref<64x16xf32, #tpu.memory_space<vmem>>, vector<16x16xf32>
    %cst = arith.constant dense<0.000000e+00> : vector<32x16xf32>
    %2 = tpu.matmul %0, %1, %cst {dimension_numbers = #tpu.dot_dimension_numbers<[1], [0], [0], [1], [0, 0, 1, 1], [], []>} : vector<32x16xf32>, vector<16x16xf32>, vector<32x16xf32> -> vector<32x16xf32>
    %c0_3 = arith.constant 0 : index
    %c0_4 = arith.constant 0 : index
    %3 = vector.load %arg5[%c0_3, %c0_4] : memref<128x16xf32, #tpu.memory_space<vmem>>, vector<32x16xf32>
    tpu.vector_store %arg5[%c0_3, %c0_4], %2 {strides = array<i32>} : memref<128x16xf32, #tpu.memory_space<vmem>>, vector<32x16xf32>,
    %c16 = arith.constant 16 : index
    %c0_5 = arith.constant 0 : index
    %4 = vector.load %arg3[%c16, %c0_5] : memref<64x16xf32, #tpu.memory_space<vmem>>, vector<16x16xf32>
    %cst_6 = arith.constant dense<0.000000e+00> : vector<32x16xf32>
    %5 = tpu.matmul %0, %4, %cst_6 {dimension_numbers = #tpu.dot_dimension_numbers<[1], [0], [0], [1], [0, 0, 1, 1], [], []>} : vector<32x16xf32>, vector<16x16xf32>, vector<32x16xf32> -> vector<32x16xf32>
    %c32 = arith.constant 32 : index
    %c0_7 = arith.constant 0 : index
    %6 = vector.load %arg5[%c32, %c0_7] : memref<128x16xf32, #tpu.memory_space<vmem>>, vector<32x16xf32>
    tpu.vector_store %arg5[%c32, %c0_7], %5 {strides = array<i32>} : memref<128x16xf32, #tpu.memory_space<vmem>>, vector<32x16xf32>,
    %c32_8 = arith.constant 32 : index
    %c0_9 = arith.constant 0 : index
    %7 = vector.load %arg3[%c32_8, %c0_9] : memref<64x16xf32, #tpu.memory_space<vmem>>, vector<16x16xf32>
    %cst_10 = arith.constant dense<0.000000e+00> : vector<32x16xf32>
    %8 = tpu.matmul %0, %7, %cst_10 {dimension_numbers = #tpu.dot_dimension_numbers<[1], [0], [0], [1], [0, 0, 1, 1], [], []>} : vector<32x16xf32>, vector<16x16xf32>, vector<32x16xf32> -> vector<32x16xf32>
    %c64 = arith.constant 64 : index
    %c0_11 = arith.constant 0 : index
    %9 = vector.load %arg5[%c64, %c0_11] : memref<128x16xf32, #tpu.memory_space<vmem>>, vector<32x16xf32>
    tpu.vector_store %arg5[%c64, %c0_11], %8 {strides = array<i32>} : memref<128x16xf32, #tpu.memory_space<vmem>>, vector<32x16xf32>,
    %c48 = arith.constant 48 : index
    %c0_12 = arith.constant 0 : index
    %10 = vector.load %arg3[%c48, %c0_12] : memref<64x16xf32, #tpu.memory_space<vmem>>, vector<16x16xf32>
    %cst_13 = arith.constant dense<0.000000e+00> : vector<32x16xf32>
    %11 = tpu.matmul %0, %10, %cst_13 {dimension_numbers = #tpu.dot_dimension_numbers<[1], [0], [0], [1], [0, 0, 1, 1], [], []>} : vector<32x16xf32>, vector<16x16xf32>, vector<32x16xf32> -> vector<32x16xf32>
    %c96 = arith.constant 96 : index
    %c0_14 = arith.constant 0 : index
    %12 = vector.load %arg5[%c96, %c0_14] : memref<128x16xf32, #tpu.memory_space<vmem>>, vector<32x16xf32>
    tpu.vector_store %arg5[%c96, %c0_14], %11 {strides = array<i32>} : memref<128x16xf32, #tpu.memory_space<vmem>>, vector<32x16xf32>,
    %c0_15 = arith.constant 0 : index
    %c0_16 = arith.constant 0 : index
    %13 = vector.load %arg5[%c0_15, %c0_16] : memref<128x16xf32, #tpu.memory_space<vmem>>, vector<128x16xf32>
    %c0_17 = arith.constant 0 : index
    %c0_18 = arith.constant 0 : index
    %14 = vector.load %arg2[%c0_17, %c0_18] : memref<16x32xf32, #tpu.memory_space<vmem>>, vector<16x32xf32>
    %cst_19 = arith.constant dense<0.000000e+00> : vector<128x32xf32>
    %15 = tpu.matmul %13, %14, %cst_19 {dimension_numbers = #tpu.dot_dimension_numbers<[1], [0], [0], [1], [0, 0, 1, 1], [], []>} : vector<128x16xf32>, vector<16x32xf32>, vector<128x32xf32> -> vector<128x32xf32>
    %c0_20 = arith.constant 0 : index
    %c0_21 = arith.constant 0 : index
    %16 = vector.load %arg4[%c0_20, %c0_21] : memref<128x32xf32, #tpu.memory_space<vmem>>, vector<128x32xf32>
    tpu.vector_store %arg4[%c0_20, %c0_21], %15 {strides = array<i32>} : memref<128x32xf32, #tpu.memory_space<vmem>>, vector<128x32xf32>,
    return
  }
  func.func @transform_0(%arg0: i32) -> (i32, i32) {
    %c0_i32 = arith.constant 0 : i32
    %c0_i32_0 = arith.constant 0 : i32
    %c0_i32_1 = arith.constant 0 : i32
    return %c0_i32, %c0_i32_0 : i32, i32
  }
  func.func @transform_1(%arg0: i32) -> (i32, i32) {
    %c0_i32 = arith.constant 0 : i32
    %c0_i32_0 = arith.constant 0 : i32
    %c0_i32_1 = arith.constant 0 : i32
    return %c0_i32, %c0_i32_0 : i32, i32
  }
  func.func @transform_2(%arg0: i32) -> (i32, i32) {
    %c0_i32 = arith.constant 0 : i32
    %c0_i32_0 = arith.constant 0 : i32
    return %arg0, %c0_i32 : i32, i32
  }
  func.func @transform_3(%arg0: i32) -> (i32, i32) {
    %c0_i32 = arith.constant 0 : i32
    %c0_i32_0 = arith.constant 0 : i32
    return %arg0, %c0_i32 : i32, i32
  }
}

</mosaic_0001>

<llo_original>
// kernel: tpu_custom_call.1
$region0: #{tpu_custom_call.1}
  #allocation0 [shape = 'u32[]', space=smem, size = 0x4, offset = 0x4, fixed_abs, tag = 'smem constant byte address 0x4 - core index']
  #allocation1 [shape = 'u32[144,128]{1,0:T(1,128)}', space=vmem, size = 0x12000, scoped, tag = 'internal scratch']
  #allocation2 [shape = 'f32[128,16]{1,0:T(8,128)}', space=vmem, size = 0x10000, scoped, tag = 'scratch operand']
  %s0 = inlined_call_operand.vmem [shape: f32[32,16], index: 0, kind: input, shape index: {}]
  %s1 = inlined_call_operand.vmem [shape: f32[16,32], index: 1, kind: input, shape index: {}]
  %s2 = inlined_call_operand.vmem [shape: f32[128,16], index: 2, kind: input, shape index: {}]
  %s3 = inlined_call_operand.vmem [shape: f32[256,32], index: 3, kind: output, shape index: {}]
  %s4 = sld [smem:[#allocation0]]
  $region45: #{tpu_custom_call.1} parent=0
    _
  %s6 = ssub.s32 1, %s4
  %s7 = scalar_select 0, %s6, %s4
  loop: start=0, step=1, limit=4
  $region2: #{tpu_custom_call.1} parent=0 // loop_pre_header
    _
  $region3: #{tpu_custom_call.1} parent=0 // loop_header
    %s9 = sphi 0, %s13
    %p10 = scmp.ge.s32.totalorder %s9, 4
    %s17 = sphi 0, %s17
    %s19 = sphi 0, %s17
    %s20 = sphi 0, %s19
    %s34 = sphi 0, %s20
    %s38 = sphi 0, %s38
    %s40 = sphi 0, %s38
    %s41 = sphi 0, %s40
    %s55 = sphi 0, %s41
    %s61 = sphi 0, %s63
    %s64 = sphi 0, %s61
    %s65 = sphi 0, %s64
    %s81 = sphi 0, %s65
    %s87 = sphi 0, %s89
    %s90 = sphi 0, %s87
    %s91 = sphi 0, %s90
    %s107 = sphi 0, %s91
  $region4: #{tpu_custom_call.1} parent=0 // loop_header_branch
    %12 = sbr.rel (%p10) target = $region8
  $region5: #{tpu_custom_call.1} parent=0 // loop_body
    %s14 = ssub.s32 %s9, 1
    %s15 = ssub.s32 %s9, 2
    %s16 = sadd.s32 %s9, 1
    %s18 = sadd.s32 %s17, 1
    %p21 = scmp.eq.s32.totalorder %s9, 1
    %p22 = scmp.ne.s32.totalorder %s17, %s19
    %p23 = scmp.eq.s32.totalorder %s9, 0
    %p24 = por %p22, %p23
    %p25 = scmp.ne.s32.totalorder %s17, %s19
    %p26 = scmp.eq.s32.totalorder %s14, 1
    %p27 = por %p25, %p26
    %p28 = scmp.ne.s32.totalorder %s19, %s20
    %p29 = scmp.eq.s32.totalorder %s14, 0
    %p30 = por %p28, %p29
    %p31 = scmp.ne.s32.totalorder %s19, %s20
    %p32 = scmp.eq.s32.totalorder %s15, 1
    %p33 = por %p31, %p32
    %p35 = scmp.ne.s32.totalorder %s20, %s34
    %p36 = scmp.eq.s32.totalorder %s15, 0
    %p37 = por %p35, %p36
    %s39 = sadd.s32 %s38, 1
    %p42 = scmp.eq.s32.totalorder %s9, 1
    %p43 = scmp.ne.s32.totalorder %s38, %s40
    %p44 = scmp.eq.s32.totalorder %s9, 0
    %p45 = por %p43, %p44
    %p46 = scmp.ne.s32.totalorder %s38, %s40
    %p47 = scmp.eq.s32.totalorder %s14, 1
    %p48 = por %p46, %p47
    %p49 = scmp.ne.s32.totalorder %s40, %s41
    %p50 = scmp.eq.s32.totalorder %s14, 0
    %p51 = por %p49, %p50
    %p52 = scmp.ne.s32.totalorder %s40, %s41
    %p53 = scmp.eq.s32.totalorder %s15, 1
    %p54 = por %p52, %p53
    %p56 = scmp.ne.s32.totalorder %s41, %s55
    %p57 = scmp.eq.s32.totalorder %s15, 0
    %p58 = por %p56, %p57
    %s59 = ssub.s32 %s9, %s16
    %p60 = scmp.eq.s32.totalorder %s59, 0
    %s62 = sadd.s32 %s61, 1
    %s63 = scalar_select %p60, %s61, %s62
    %p66 = pneg %p60
    %p67 = scmp.eq.s32.totalorder %s9, 1
    %p68 = por %p66, %p67
    %p69 = scmp.ne.s32.totalorder %s61, %s64
    %p70 = scmp.eq.s32.totalorder %s9, 0
    %p71 = por %p69, %p70
    %p72 = scmp.ne.s32.totalorder %s61, %s64
    %p73 = scmp.eq.s32.totalorder %s14, 1
    %p74 = por %p72, %p73
    %p75 = scmp.ne.s32.totalorder %s64, %s65
    %p76 = scmp.eq.s32.totalorder %s14, 0
    %p77 = por %p75, %p76
    %p78 = scmp.ne.s32.totalorder %s64, %s65
    %p79 = scmp.eq.s32.totalorder %s15, 1
    %p80 = por %p78, %p79
    %p82 = scmp.ne.s32.totalorder %s65, %s81
    %p83 = scmp.eq.s32.totalorder %s15, 0
    %p84 = por %p82, %p83
    %s85 = ssub.s32 %s9, %s16
    %p86 = scmp.eq.s32.totalorder %s85, 0
    %s88 = sadd.s32 %s87, 1
    %s89 = scalar_select %p86, %s87, %s88
    %p92 = pneg %p86
    %p93 = scmp.eq.s32.totalorder %s9, 1
    %p94 = por %p92, %p93
    %p95 = scmp.ne.s32.totalorder %s87, %s90
    %p96 = scmp.eq.s32.totalorder %s9, 0
    %p97 = por %p95, %p96
    %p98 = scmp.ne.s32.totalorder %s87, %s90
    %p99 = scmp.eq.s32.totalorder %s14, 1
    %p100 = por %p98, %p99
    %p101 = scmp.ne.s32.totalorder %s90, %s91
    %p102 = scmp.eq.s32.totalorder %s14, 0
    %p103 = por %p101, %p102
    %p104 = scmp.ne.s32.totalorder %s90, %s91
    %p105 = scmp.eq.s32.totalorder %s15, 1
    %p106 = por %p104, %p105
    %p108 = scmp.ne.s32.totalorder %s91, %s107
    %p109 = scmp.eq.s32.totalorder %s15, 0
    %p110 = por %p108, %p109
    %p111 = scmp.le.s32.totalorder 1, %s9
    %p112 = scmp.lt.s32.totalorder %s9, 3
    %p113 = pnand %p111, %p112
    %p114 = pneg %p113
    // Predicated region
    $region9: #{tpu_custom_call.1} parent=5 // pred_check
      _
    $region10: #{tpu_custom_call.1} parent=5 // pred_check_branch
      %116 = sbr.rel (%p113) target = $region12
    $region11: #{tpu_custom_call.1} parent=5 // pred_region
      %s117 = ssub.s32 %s9, 1
      // Predicated region
      $region13: #{tpu_custom_call.1} parent=11 // pred_check
        %p118 = pneg %p30
      $region14: #{tpu_custom_call.1} parent=11 // pred_check_branch
        %120 = sbr.rel (%p118) target = $region16
      $region15: #{tpu_custom_call.1} parent=11 // pred_region
        _
      $region16: #{tpu_custom_call.1} parent=11 // pred_fallthru
        _
      // Predicated region
      $region17: #{tpu_custom_call.1} parent=11 // pred_check
        %p121 = pneg %p51
      $region18: #{tpu_custom_call.1} parent=11 // pred_check_branch
        %123 = sbr.rel (%p121) target = $region20
      $region19: #{tpu_custom_call.1} parent=11 // pred_region
        _
      $region20: #{tpu_custom_call.1} parent=11 // pred_fallthru
        _
    $region12: #{tpu_custom_call.1} parent=5 // pred_fallthru
      _
    %p124 = scmp.lt.s32.totalorder %s9, 2
    // Predicated region
    $region21: #{tpu_custom_call.1} parent=5 // pred_check
      %p125 = pneg %p124
    $region22: #{tpu_custom_call.1} parent=5 // pred_check_branch
      %127 = sbr.rel (%p125) target = $region24
    $region23: #{tpu_custom_call.1} parent=5 // pred_region
      // Predicated region
      $region25: #{tpu_custom_call.1} parent=23 // pred_check
        %p128 = pneg %p71
      $region26: #{tpu_custom_call.1} parent=23 // pred_check_branch
        %130 = sbr.rel (%p128) target = $region28
      $region27: #{tpu_custom_call.1} parent=23 // pred_region
        %s131 = smul.u32 8, %s9
        %p132 = scmp.lt.s32.totalorder %s131, 15
        %s133 = scalar_select %p132, %s131, 15
        %s134 = smul.addr %s133, 8
        %s135 = scalar_lea.vmem %s2, %s134
        %s136 = smul.u32 8, %s9
      $region28: #{tpu_custom_call.1} parent=23 // pred_fallthru
        _
    $region24: #{tpu_custom_call.1} parent=5 // pred_fallthru
      _
    %p137 = scmp.le.s32.totalorder 1, %s9
    %p138 = scmp.lt.s32.totalorder %s9, 3
    %p139 = pnand %p137, %p138
    %p140 = pneg %p139
    // Predicated region
    $region29: #{tpu_custom_call.1} parent=5 // pred_check
      _
    $region30: #{tpu_custom_call.1} parent=5 // pred_check_branch
      %142 = sbr.rel (%p139) target = $region32
    $region31: #{tpu_custom_call.1} parent=5 // pred_region
      %s143 = ssub.s32 %s9, 1
      %p144 = pneg %p30
      %p145 = pneg %p27
      %p146 = pneg %p51
      %p147 = pneg %p48
      %s148 = smul.u32 8, %s14
      %p149 = scmp.lt.s32.totalorder %s148, 15
      %s150 = scalar_select %p149, %s148, 15
      %s151 = smul.addr %s150, 8
      %s152 = scalar_lea.vmem %s2, %s151
      %p153 = pneg %p77
      %p154 = pneg %p74
      %p155 = pneg %p103
      %p156 = pneg %p100
      %s157 = smul.u32 16, %s14
      %p158 = scmp.lt.s32.totalorder %s157, 31
      %s159 = scalar_select %p158, %s157, 31
      %s160 = smul.addr %s159, 8
      %s161 = scalar_lea.vmem %s3, %s160
      %s162 = smul.u32 8, %s14
      %p163 = scmp.lt.s32.totalorder %s162, 15
      %s164 = scalar_select %p163, %s162, 15
      %s165 = smul.addr %s164, 8
      %s166 = scalar_lea.vmem %s2, %s165
      %s167 = smul.u32 8, %s14
      %s168 = smul.u32 16, %s14
      %p169 = scmp.lt.s32.totalorder %s168, 31
      %s170 = scalar_select %p169, %s168, 31
      %s171 = smul.addr %s170, 8
      %s172 = scalar_lea.vmem %s3, %s171
      %s173 = smul.u32 16, %s14
      %v174 = vld [vmem:[%s0] sm:$0xff]
      %v175 = vld [vmem:[%s0 + $0x8] sm:$0xff]
      %v176 = vld [vmem:[%s0 + $0x10] sm:$0xff]
      %v177 = vld [vmem:[%s0 + $0x18] sm:$0xff]
      %v178 = vld [vmem:[%s166] sm:$0xff]
      %v179 = vld [vmem:[%s166 + $0x8] sm:$0xff]
      %vm180 = vcmask 130048
      %v182 = vsel %vm180, %v174, 0
      %v185 = vsel %vm180, %v175, 0
      %v188 = vsel %vm180, %v176, 0
      %v191 = vsel %vm180, %v177, 0
      %193 = vmatprep.subr.mxu0 0.0
      %194 = vmatpush1.msra.mxu0 %v178
      %195 = vmatprep.subr.mxu0 0.0
      %196 = vmatpush1.msra.mxu0 %v179
      %197 = vmatprep.subr.mxu0 0.0
      %198 = vmatpush1.msra.mxu0 0.0
      %199 = vmatprep.subr.mxu0 0.0
      %200 = vmatpush1.msra.mxu0 0.0
      %201 = vmatprep.subr.mxu0 0.0
      %202 = vmatpush1.msra.mxu0 0.0
      %203 = vmatprep.subr.mxu0 0.0
      %204 = vmatpush1.msra.mxu0 0.0
      %205 = vmatprep.subr.mxu0 0.0
      %206 = vmatpush1.msra.mxu0 0.0
      %207 = vmatprep.subr.mxu0 0.0
      %208 = vmatpush1.msra.mxu0 0.0
      %209 = vmatprep.subr.mxu0 0.0
      %210 = vmatpush1.msra.mxu0 0.0
      %211 = vmatprep.subr.mxu0 0.0
      %212 = vmatpush1.msra.mxu0 0.0
      %213 = vmatprep.subr.mxu0 0.0
      %214 = vmatpush1.msra.mxu0 0.0
      %215 = vmatprep.subr.mxu0 0.0
      %216 = vmatpush1.msra.mxu0 0.0
      %217 = vmatprep.subr.mxu0 0.0
      %218 = vmatpush1.msra.mxu0 0.0
      %219 = vmatprep.subr.mxu0 0.0
      %220 = vmatpush1.msra.mxu0 0.0
      %221 = vmatprep.subr.mxu0 0.0
      %222 = vmatpush1.msra.mxu0 0.0
      %223 = vmatprep.subr.mxu0 0.0
      %224 = vmatpush1.msra.mxu0 0.0
      %225 = vmatprep.subr.mxu0 0.0
      %226 = vmatpush1.msra.mxu0 0.0
      %227 = vmatprep.subr.mxu0 0.0
      %228 = vmatpush1.msra.mxu0 0.0
      %229 = vmatprep.subr.mxu0 0.0
      %230 = vmatpush1.msra.mxu0 0.0
      %231 = vmatprep.subr.mxu0 0.0
      %232 = vmatpush1.msra.mxu0 0.0
      %233 = vmatprep.subr.mxu0 0.0
      %234 = vmatpush1.msra.mxu0 0.0
      %235 = vmatprep.subr.mxu0 0.0
      %236 = vmatpush1.msra.mxu0 0.0
      %237 = vmatprep.subr.mxu0 0.0
      %238 = vmatpush1.msra.mxu0 0.0
      %239 = vmatprep.subr.mxu0 0.0
      %240 = vmatpush1.msra.mxu0 0.0
      %241 = vmatprep.subr.mxu0 0.0
      %242 = vmatpush1.msra.mxu0 0.0
      %243 = vmatprep.subr.mxu0 0.0
      %244 = vmatpush1.msra.mxu0 0.0
      %245 = vmatprep.subr.mxu0 0.0
      %246 = vmatpush1.msra.mxu0 0.0
      %247 = vmatprep.subr.mxu0 0.0
      %248 = vmatpush1.msra.mxu0 0.0
      %249 = vmatprep.subr.mxu0 0.0
      %250 = vmatpush1.msra.mxu0 0.0
      %251 = vmatprep.subr.mxu0 0.0
      %252 = vmatpush1.msra.mxu0 0.0
      %253 = vmatprep.subr.mxu0 0.0
      %254 = vmatpush1.msra.mxu0 0.0
      %255 = vmatprep.subr.mxu0 0.0
      %256 = vmatpush1.msra.mxu0 0.0
      %257 = vmatprep.mubr.f32.mxu0 0.0
      %258 = vmatmul.mubr.f32.gmra.mrb[0].mxu0 %v182
      %v259 = vpop.f32.mrb[0].mxu0
      %v260 = vadd.f32 0.0, %v259
      %v261 = vpop.f32.mrb[0].mxu0
      %262 = vmatprep.mubr.f32.mxu0 0.0
      %263 = vmatmul.mubr.f32.gmra.mrb[0].mxu0 %v185
      %v264 = vpop.f32.mrb[0].mxu0
      %v265 = vadd.f32 0.0, %v264
      %v266 = vpop.f32.mrb[0].mxu0
      %267 = vmatprep.mubr.f32.mxu0 0.0
      %268 = vmatmul.mubr.f32.gmra.mrb[0].mxu0 %v188
      %v269 = vpop.f32.mrb[0].mxu0
      %v270 = vadd.f32 0.0, %v269
      %v271 = vpop.f32.mrb[0].mxu0
      %272 = vmatprep.mubr.f32.mxu0 0.0
      %273 = vmatmul.mubr.f32.gmra.mrb[0].mxu0 %v191
      %v274 = vpop.f32.mrb[0].mxu0
      %v275 = vadd.f32 0.0, %v274
      %v276 = vpop.f32.mrb[0].mxu0
      %277 = vdwg.mxu0
      %278 = vst.msk [vmem:[#allocation2] sm:$0xff] %vm180, %v260
      %279 = vst.msk [vmem:[#allocation2 + $0x8] sm:$0xff] %vm180, %v265
      %280 = vst.msk [vmem:[#allocation2 + $0x10] sm:$0xff] %vm180, %v270
      %281 = vst.msk [vmem:[#allocation2 + $0x18] sm:$0xff] %vm180, %v275
      %v282 = vld [vmem:[%s166 + $0x10] sm:$0xff]
      %v283 = vld [vmem:[%s166 + $0x18] sm:$0xff]
      %284 = vmatprep.subr.mxu0 0.0
      %285 = vmatpush1.msra.mxu0 %v282
      %286 = vmatprep.subr.mxu0 0.0
      %287 = vmatpush1.msra.mxu0 %v283
      %288 = vmatprep.subr.mxu0 0.0
      %289 = vmatpush1.msra.mxu0 0.0
      %290 = vmatprep.subr.mxu0 0.0
      %291 = vmatpush1.msra.mxu0 0.0
      %292 = vmatprep.subr.mxu0 0.0
      %293 = vmatpush1.msra.mxu0 0.0
      %294 = vmatprep.subr.mxu0 0.0
      %295 = vmatpush1.msra.mxu0 0.0
      %296 = vmatprep.subr.mxu0 0.0
      %297 = vmatpush1.msra.mxu0 0.0
      %298 = vmatprep.subr.mxu0 0.0
      %299 = vmatpush1.msra.mxu0 0.0
      %300 = vmatprep.subr.mxu0 0.0
      %301 = vmatpush1.msra.mxu0 0.0
      %302 = vmatprep.subr.mxu0 0.0
      %303 = vmatpush1.msra.mxu0 0.0
      %304 = vmatprep.subr.mxu0 0.0
      %305 = vmatpush1.msra.mxu0 0.0
      %306 = vmatprep.subr.mxu0 0.0
      %307 = vmatpush1.msra.mxu0 0.0
      %308 = vmatprep.subr.mxu0 0.0
      %309 = vmatpush1.msra.mxu0 0.0
      %310 = vmatprep.subr.mxu0 0.0
      %311 = vmatpush1.msra.mxu0 0.0
      %312 = vmatprep.subr.mxu0 0.0
      %313 = vmatpush1.msra.mxu0 0.0
      %314 = vmatprep.subr.mxu0 0.0
      %315 = vmatpush1.msra.mxu0 0.0
      %316 = vmatprep.subr.mxu0 0.0
      %317 = vmatpush1.msra.mxu0 0.0
      %318 = vmatprep.subr.mxu0 0.0
      %319 = vmatpush1.msra.mxu0 0.0
      %320 = vmatprep.subr.mxu0 0.0
      %321 = vmatpush1.msra.mxu0 0.0
      %322 = vmatprep.subr.mxu0 0.0
      %323 = vmatpush1.msra.mxu0 0.0
      %324 = vmatprep.subr.mxu0 0.0
      %325 = vmatpush1.msra.mxu0 0.0
      %326 = vmatprep.subr.mxu0 0.0
      %327 = vmatpush1.msra.mxu0 0.0
      %328 = vmatprep.subr.mxu0 0.0
      %329 = vmatpush1.msra.mxu0 0.0
      %330 = vmatprep.subr.mxu0 0.0
      %331 = vmatpush1.msra.mxu0 0.0
      %332 = vmatprep.subr.mxu0 0.0
      %333 = vmatpush1.msra.mxu0 0.0
      %334 = vmatprep.subr.mxu0 0.0
      %335 = vmatpush1.msra.mxu0 0.0
      %336 = vmatprep.subr.mxu0 0.0
      %337 = vmatpush1.msra.mxu0 0.0
      %338 = vmatprep.subr.mxu0 0.0
      %339 = vmatpush1.msra.mxu0 0.0
      %340 = vmatprep.subr.mxu0 0.0
      %341 = vmatpush1.msra.mxu0 0.0
      %342 = vmatprep.subr.mxu0 0.0
      %343 = vmatpush1.msra.mxu0 0.0
      %344 = vmatprep.subr.mxu0 0.0
      %345 = vmatpush1.msra.mxu0 0.0
      %346 = vmatprep.subr.mxu0 0.0
      %347 = vmatpush1.msra.mxu0 0.0
      %348 = vmatprep.mubr.f32.mxu0 0.0
      %349 = vmatmul.mubr.f32.gmra.mrb[0].mxu0 %v182
      %v350 = vpop.f32.mrb[0].mxu0
      %v351 = vadd.f32 0.0, %v350
      %v352 = vpop.f32.mrb[0].mxu0
      %353 = vmatprep.mubr.f32.mxu0 0.0
      %354 = vmatmul.mubr.f32.gmra.mrb[0].mxu0 %v185
      %v355 = vpop.f32.mrb[0].mxu0
      %v356 = vadd.f32 0.0, %v355
      %v357 = vpop.f32.mrb[0].mxu0
      %358 = vmatprep.mubr.f32.mxu0 0.0
      %359 = vmatmul.mubr.f32.gmra.mrb[0].mxu0 %v188
      %v360 = vpop.f32.mrb[0].mxu0
      %v361 = vadd.f32 0.0, %v360
      %v362 = vpop.f32.mrb[0].mxu0
      %363 = vmatprep.mubr.f32.mxu0 0.0
      %364 = vmatmul.mubr.f32.gmra.mrb[0].mxu0 %v191
      %v365 = vpop.f32.mrb[0].mxu0
      %v366 = vadd.f32 0.0, %v365
      %v367 = vpop.f32.mrb[0].mxu0
      %368 = vdwg.mxu0
      %369 = vst.msk [vmem:[#allocation2 + $0x20] sm:$0xff] %vm180, %v351
      %370 = vst.msk [vmem:[#allocation2 + $0x28] sm:$0xff] %vm180, %v356
      %371 = vst.msk [vmem:[#allocation2 + $0x30] sm:$0xff] %vm180, %v361
      %372 = vst.msk [vmem:[#allocation2 + $0x38] sm:$0xff] %vm180, %v366
      %v373 = vld [vmem:[%s166 + $0x20] sm:$0xff]
      %v374 = vld [vmem:[%s166 + $0x28] sm:$0xff]
      %375 = vmatprep.subr.mxu0 0.0
      %376 = vmatpush1.msra.mxu0 %v373
      %377 = vmatprep.subr.mxu0 0.0
      %378 = vmatpush1.msra.mxu0 %v374
      %379 = vmatprep.subr.mxu0 0.0
      %380 = vmatpush1.msra.mxu0 0.0
      %381 = vmatprep.subr.mxu0 0.0
      %382 = vmatpush1.msra.mxu0 0.0
      %383 = vmatprep.subr.mxu0 0.0
      %384 = vmatpush1.msra.mxu0 0.0
      %385 = vmatprep.subr.mxu0 0.0
      %386 = vmatpush1.msra.mxu0 0.0
      %387 = vmatprep.subr.mxu0 0.0
      %388 = vmatpush1.msra.mxu0 0.0
      %389 = vmatprep.subr.mxu0 0.0
      %390 = vmatpush1.msra.mxu0 0.0
      %391 = vmatprep.subr.mxu0 0.0
      %392 = vmatpush1.msra.mxu0 0.0
      %393 = vmatprep.subr.mxu0 0.0
      %394 = vmatpush1.msra.mxu0 0.0
      %395 = vmatprep.subr.mxu0 0.0
      %396 = vmatpush1.msra.mxu0 0.0
      %397 = vmatprep.subr.mxu0 0.0
      %398 = vmatpush1.msra.mxu0 0.0
      %399 = vmatprep.subr.mxu0 0.0
      %400 = vmatpush1.msra.mxu0 0.0
      %401 = vmatprep.subr.mxu0 0.0
      %402 = vmatpush1.msra.mxu0 0.0
      %403 = vmatprep.subr.mxu0 0.0
      %404 = vmatpush1.msra.mxu0 0.0
      %405 = vmatprep.subr.mxu0 0.0
      %406 = vmatpush1.msra.mxu0 0.0
      %407 = vmatprep.subr.mxu0 0.0
      %408 = vmatpush1.msra.mxu0 0.0
      %409 = vmatprep.subr.mxu0 0.0
      %410 = vmatpush1.msra.mxu0 0.0
      %411 = vmatprep.subr.mxu0 0.0
      %412 = vmatpush1.msra.mxu0 0.0
      %413 = vmatprep.subr.mxu0 0.0
      %414 = vmatpush1.msra.mxu0 0.0
      %415 = vmatprep.subr.mxu0 0.0
      %416 = vmatpush1.msra.mxu0 0.0
      %417 = vmatprep.subr.mxu0 0.0
      %418 = vmatpush1.msra.mxu0 0.0
      %419 = vmatprep.subr.mxu0 0.0
      %420 = vmatpush1.msra.mxu0 0.0
      %421 = vmatprep.subr.mxu0 0.0
      %422 = vmatpush1.msra.mxu0 0.0
      %423 = vmatprep.subr.mxu0 0.0
      %424 = vmatpush1.msra.mxu0 0.0
      %425 = vmatprep.subr.mxu0 0.0
      %426 = vmatpush1.msra.mxu0 0.0
      %427 = vmatprep.subr.mxu0 0.0
      %428 = vmatpush1.msra.mxu0 0.0
      %429 = vmatprep.subr.mxu0 0.0
      %430 = vmatpush1.msra.mxu0 0.0
      %431 = vmatprep.subr.mxu0 0.0
      %432 = vmatpush1.msra.mxu0 0.0
      %433 = vmatprep.subr.mxu0 0.0
      %434 = vmatpush1.msra.mxu0 0.0
      %435 = vmatprep.subr.mxu0 0.0
      %436 = vmatpush1.msra.mxu0 0.0
      %437 = vmatprep.subr.mxu0 0.0
      %438 = vmatpush1.msra.mxu0 0.0
      %439 = vmatprep.mubr.f32.mxu0 0.0
      %440 = vmatmul.mubr.f32.gmra.mrb[0].mxu0 %v182
      %v441 = vpop.f32.mrb[0].mxu0
      %v442 = vadd.f32 0.0, %v441
      %v443 = vpop.f32.mrb[0].mxu0
      %444 = vmatprep.mubr.f32.mxu0 0.0
      %445 = vmatmul.mubr.f32.gmra.mrb[0].mxu0 %v185
      %v446 = vpop.f32.mrb[0].mxu0
      %v447 = vadd.f32 0.0, %v446
      %v448 = vpop.f32.mrb[0].mxu0
      %449 = vmatprep.mubr.f32.mxu0 0.0
      %450 = vmatmul.mubr.f32.gmra.mrb[0].mxu0 %v188
      %v451 = vpop.f32.mrb[0].mxu0
      %v452 = vadd.f32 0.0, %v451
      %v453 = vpop.f32.mrb[0].mxu0
      %454 = vmatprep.mubr.f32.mxu0 0.0
      %455 = vmatmul.mubr.f32.gmra.mrb[0].mxu0 %v191
      %v456 = vpop.f32.mrb[0].mxu0
      %v457 = vadd.f32 0.0, %v456
      %v458 = vpop.f32.mrb[0].mxu0
      %459 = vdwg.mxu0
      %460 = vst.msk [vmem:[#allocation2 + $0x40] sm:$0xff] %vm180, %v442
      %461 = vst.msk [vmem:[#allocation2 + $0x48] sm:$0xff] %vm180, %v447
      %462 = vst.msk [vmem:[#allocation2 + $0x50] sm:$0xff] %vm180, %v452
      %463 = vst.msk [vmem:[#allocation2 + $0x58] sm:$0xff] %vm180, %v457
      %v464 = vld [vmem:[%s166 + $0x30] sm:$0xff]
      %v465 = vld [vmem:[%s166 + $0x38] sm:$0xff]
      %466 = vmatprep.subr.mxu0 0.0
      %467 = vmatpush1.msra.mxu0 %v464
      %468 = vmatprep.subr.mxu0 0.0
      %469 = vmatpush1.msra.mxu0 %v465
      %470 = vmatprep.subr.mxu0 0.0
      %471 = vmatpush1.msra.mxu0 0.0
      %472 = vmatprep.subr.mxu0 0.0
      %473 = vmatpush1.msra.mxu0 0.0
      %474 = vmatprep.subr.mxu0 0.0
      %475 = vmatpush1.msra.mxu0 0.0
      %476 = vmatprep.subr.mxu0 0.0
      %477 = vmatpush1.msra.mxu0 0.0
      %478 = vmatprep.subr.mxu0 0.0
      %479 = vmatpush1.msra.mxu0 0.0
      %480 = vmatprep.subr.mxu0 0.0
      %481 = vmatpush1.msra.mxu0 0.0
      %482 = vmatprep.subr.mxu0 0.0
      %483 = vmatpush1.msra.mxu0 0.0
      %484 = vmatprep.subr.mxu0 0.0
      %485 = vmatpush1.msra.mxu0 0.0
      %486 = vmatprep.subr.mxu0 0.0
      %487 = vmatpush1.msra.mxu0 0.0
      %488 = vmatprep.subr.mxu0 0.0
      %489 = vmatpush1.msra.mxu0 0.0
      %490 = vmatprep.subr.mxu0 0.0
      %491 = vmatpush1.msra.mxu0 0.0
      %492 = vmatprep.subr.mxu0 0.0
      %493 = vmatpush1.msra.mxu0 0.0
      %494 = vmatprep.subr.mxu0 0.0
      %495 = vmatpush1.msra.mxu0 0.0
      %496 = vmatprep.subr.mxu0 0.0
      %497 = vmatpush1.msra.mxu0 0.0
      %498 = vmatprep.subr.mxu0 0.0
      %499 = vmatpush1.msra.mxu0 0.0
      %500 = vmatprep.subr.mxu0 0.0
      %501 = vmatpush1.msra.mxu0 0.0
      %502 = vmatprep.subr.mxu0 0.0
      %503 = vmatpush1.msra.mxu0 0.0
      %504 = vmatprep.subr.mxu0 0.0
      %505 = vmatpush1.msra.mxu0 0.0
      %506 = vmatprep.subr.mxu0 0.0
      %507 = vmatpush1.msra.mxu0 0.0
      %508 = vmatprep.subr.mxu0 0.0
      %509 = vmatpush1.msra.mxu0 0.0
      %510 = vmatprep.subr.mxu0 0.0
      %511 = vmatpush1.msra.mxu0 0.0
      %512 = vmatprep.subr.mxu0 0.0
      %513 = vmatpush1.msra.mxu0 0.0
      %514 = vmatprep.subr.mxu0 0.0
      %515 = vmatpush1.msra.mxu0 0.0
      %516 = vmatprep.subr.mxu0 0.0
      %517 = vmatpush1.msra.mxu0 0.0
      %518 = vmatprep.subr.mxu0 0.0
      %519 = vmatpush1.msra.mxu0 0.0
      %520 = vmatprep.subr.mxu0 0.0
      %521 = vmatpush1.msra.mxu0 0.0
      %522 = vmatprep.subr.mxu0 0.0
      %523 = vmatpush1.msra.mxu0 0.0
      %524 = vmatprep.subr.mxu0 0.0
      %525 = vmatpush1.msra.mxu0 0.0
      %526 = vmatprep.subr.mxu0 0.0
      %527 = vmatpush1.msra.mxu0 0.0
      %528 = vmatprep.subr.mxu0 0.0
      %529 = vmatpush1.msra.mxu0 0.0
      %530 = vmatprep.mubr.f32.mxu0 0.0
      %531 = vmatmul.mubr.f32.gmra.mrb[0].mxu0 %v182
      %v532 = vpop.f32.mrb[0].mxu0
      %v533 = vadd.f32 0.0, %v532
      %v534 = vpop.f32.mrb[0].mxu0
      %535 = vmatprep.mubr.f32.mxu0 0.0
      %536 = vmatmul.mubr.f32.gmra.mrb[0].mxu0 %v185
      %v537 = vpop.f32.mrb[0].mxu0
      %v538 = vadd.f32 0.0, %v537
      %v539 = vpop.f32.mrb[0].mxu0
      %540 = vmatprep.mubr.f32.mxu0 0.0
      %541 = vmatmul.mubr.f32.gmra.mrb[0].mxu0 %v188
      %v542 = vpop.f32.mrb[0].mxu0
      %v543 = vadd.f32 0.0, %v542
      %v544 = vpop.f32.mrb[0].mxu0
      %545 = vmatprep.mubr.f32.mxu0 0.0
      %546 = vmatmul.mubr.f32.gmra.mrb[0].mxu0 %v191
      %v547 = vpop.f32.mrb[0].mxu0
      %v548 = vadd.f32 0.0, %v547
      %v549 = vpop.f32.mrb[0].mxu0
      %550 = vdwg.mxu0
      %551 = vst.msk [vmem:[#allocation2 + $0x60] sm:$0xff] %vm180, %v533
      %552 = vst.msk [vmem:[#allocation2 + $0x68] sm:$0xff] %vm180, %v538
      %553 = vst.msk [vmem:[#allocation2 + $0x70] sm:$0xff] %vm180, %v543
      %554 = vst.msk [vmem:[#allocation2 + $0x78] sm:$0xff] %vm180, %v548
      %v555 = vld [vmem:[#allocation2] sm:$0xff]
      %v556 = vld [vmem:[#allocation2 + $0x8] sm:$0xff]
      %v557 = vld [vmem:[#allocation2 + $0x10] sm:$0xff]
      %v558 = vld [vmem:[#allocation2 + $0x18] sm:$0xff]
      %v559 = vld [vmem:[#allocation2 + $0x20] sm:$0xff]
      %v560 = vld [vmem:[#allocation2 + $0x28] sm:$0xff]
      %v561 = vld [vmem:[#allocation2 + $0x30] sm:$0xff]
      %v562 = vld [vmem:[#allocation2 + $0x38] sm:$0xff]
      %v563 = vld [vmem:[#allocation2 + $0x40] sm:$0xff]
      %v564 = vld [vmem:[#allocation2 + $0x48] sm:$0xff]
      %v565 = vld [vmem:[#allocation2 + $0x50] sm:$0xff]
      %v566 = vld [vmem:[#allocation2 + $0x58] sm:$0xff]
      %v567 = vld [vmem:[#allocation2 + $0x60] sm:$0xff]
      %v568 = vld [vmem:[#allocation2 + $0x68] sm:$0xff]
      %v569 = vld [vmem:[#allocation2 + $0x70] sm:$0xff]
      %v570 = vld [vmem:[#allocation2 + $0x78] sm:$0xff]
      %v571 = vld [vmem:[%s1] sm:$0xff]
      %v572 = vld [vmem:[%s1 + $0x8] sm:$0xff]
      %v574 = vsel %vm180, %v555, 0
      %v577 = vsel %vm180, %v556, 0
      %v580 = vsel %vm180, %v557, 0
      %v583 = vsel %vm180, %v558, 0
      %v586 = vsel %vm180, %v559, 0
      %v589 = vsel %vm180, %v560, 0
      %v592 = vsel %vm180, %v561, 0
      %v595 = vsel %vm180, %v562, 0
      %v598 = vsel %vm180, %v563, 0
      %v601 = vsel %vm180, %v564, 0
      %v604 = vsel %vm180, %v565, 0
      %v607 = vsel %vm180, %v566, 0
      %v610 = vsel %vm180, %v567, 0
      %v613 = vsel %vm180, %v568, 0
      %v616 = vsel %vm180, %v569, 0
      %v619 = vsel %vm180, %v570, 0
      %621 = vmatprep.subr.mxu0 0.0
      %622 = vmatpush1.msra.mxu0 %v571
      %623 = vmatprep.subr.mxu0 0.0
      %624 = vmatpush1.msra.mxu0 %v572
      %625 = vmatprep.subr.mxu0 0.0
      %626 = vmatpush1.msra.mxu0 0.0
      %627 = vmatprep.subr.mxu0 0.0
      %628 = vmatpush1.msra.mxu0 0.0
      %629 = vmatprep.subr.mxu0 0.0
      %630 = vmatpush1.msra.mxu0 0.0
      %631 = vmatprep.subr.mxu0 0.0
      %632 = vmatpush1.msra.mxu0 0.0
      %633 = vmatprep.subr.mxu0 0.0
      %634 = vmatpush1.msra.mxu0 0.0
      %635 = vmatprep.subr.mxu0 0.0
      %636 = vmatpush1.msra.mxu0 0.0
      %637 = vmatprep.subr.mxu0 0.0
      %638 = vmatpush1.msra.mxu0 0.0
      %639 = vmatprep.subr.mxu0 0.0
      %640 = vmatpush1.msra.mxu0 0.0
      %641 = vmatprep.subr.mxu0 0.0
      %642 = vmatpush1.msra.mxu0 0.0
      %643 = vmatprep.subr.mxu0 0.0
      %644 = vmatpush1.msra.mxu0 0.0
      %645 = vmatprep.subr.mxu0 0.0
      %646 = vmatpush1.msra.mxu0 0.0
      %647 = vmatprep.subr.mxu0 0.0
      %648 = vmatpush1.msra.mxu0 0.0
      %649 = vmatprep.subr.mxu0 0.0
      %650 = vmatpush1.msra.mxu0 0.0
      %651 = vmatprep.subr.mxu0 0.0
      %652 = vmatpush1.msra.mxu0 0.0
      %653 = vmatprep.subr.mxu0 0.0
      %654 = vmatpush1.msra.mxu0 0.0
      %655 = vmatprep.subr.mxu0 0.0
      %656 = vmatpush1.msra.mxu0 0.0
      %657 = vmatprep.subr.mxu0 0.0
      %658 = vmatpush1.msra.mxu0 0.0
      %659 = vmatprep.subr.mxu0 0.0
      %660 = vmatpush1.msra.mxu0 0.0
      %661 = vmatprep.subr.mxu0 0.0
      %662 = vmatpush1.msra.mxu0 0.0
      %663 = vmatprep.subr.mxu0 0.0
      %664 = vmatpush1.msra.mxu0 0.0
      %665 = vmatprep.subr.mxu0 0.0
      %666 = vmatpush1.msra.mxu0 0.0
      %667 = vmatprep.subr.mxu0 0.0
      %668 = vmatpush1.msra.mxu0 0.0
      %669 = vmatprep.subr.mxu0 0.0
      %670 = vmatpush1.msra.mxu0 0.0
      %671 = vmatprep.subr.mxu0 0.0
      %672 = vmatpush1.msra.mxu0 0.0
      %673 = vmatprep.subr.mxu0 0.0
      %674 = vmatpush1.msra.mxu0 0.0
      %675 = vmatprep.subr.mxu0 0.0
      %676 = vmatpush1.msra.mxu0 0.0
      %677 = vmatprep.subr.mxu0 0.0
      %678 = vmatpush1.msra.mxu0 0.0
      %679 = vmatprep.subr.mxu0 0.0
      %680 = vmatpush1.msra.mxu0 0.0
      %681 = vmatprep.subr.mxu0 0.0
      %682 = vmatpush1.msra.mxu0 0.0
      %683 = vmatprep.subr.mxu0 0.0
      %684 = vmatpush1.msra.mxu0 0.0
      %685 = vmatprep.mubr.f32.mxu0 0.0
      %686 = vmatmul.mubr.f32.gmra.mrb[0].mxu0 %v574
      %v687 = vpop.f32.mrb[0].mxu0
      %v688 = vadd.f32 0.0, %v687
      %v689 = vpop.f32.mrb[0].mxu0
      %690 = vmatprep.mubr.f32.mxu0 0.0
      %691 = vmatmul.mubr.f32.gmra.mrb[0].mxu0 %v577
      %v692 = vpop.f32.mrb[0].mxu0
      %v693 = vadd.f32 0.0, %v692
      %v694 = vpop.f32.mrb[0].mxu0
      %695 = vmatprep.mubr.f32.mxu0 0.0
      %696 = vmatmul.mubr.f32.gmra.mrb[0].mxu0 %v580
      %v697 = vpop.f32.mrb[0].mxu0
      %v698 = vadd.f32 0.0, %v697
      %v699 = vpop.f32.mrb[0].mxu0
      %700 = vmatprep.mubr.f32.mxu0 0.0
      %701 = vmatmul.mubr.f32.gmra.mrb[0].mxu0 %v583
      %v702 = vpop.f32.mrb[0].mxu0
      %v703 = vadd.f32 0.0, %v702
      %v704 = vpop.f32.mrb[0].mxu0
      %705 = vmatprep.mubr.f32.mxu0 0.0
      %706 = vmatmul.mubr.f32.gmra.mrb[0].mxu0 %v586
      %v707 = vpop.f32.mrb[0].mxu0
      %v708 = vadd.f32 0.0, %v707
      %v709 = vpop.f32.mrb[0].mxu0
      %710 = vmatprep.mubr.f32.mxu0 0.0
      %711 = vmatmul.mubr.f32.gmra.mrb[0].mxu0 %v589
      %v712 = vpop.f32.mrb[0].mxu0
      %v713 = vadd.f32 0.0, %v712
      %v714 = vpop.f32.mrb[0].mxu0
      %715 = vmatprep.mubr.f32.mxu0 0.0
      %716 = vmatmul.mubr.f32.gmra.mrb[0].mxu0 %v592
      %v717 = vpop.f32.mrb[0].mxu0
      %v718 = vadd.f32 0.0, %v717
      %v719 = vpop.f32.mrb[0].mxu0
      %720 = vmatprep.mubr.f32.mxu0 0.0
      %721 = vmatmul.mubr.f32.gmra.mrb[0].mxu0 %v595
      %v722 = vpop.f32.mrb[0].mxu0
      %v723 = vadd.f32 0.0, %v722
      %v724 = vpop.f32.mrb[0].mxu0
      %725 = vmatprep.mubr.f32.mxu0 0.0
      %726 = vmatmul.mubr.f32.gmra.mrb[0].mxu0 %v598
      %v727 = vpop.f32.mrb[0].mxu0
      %v728 = vadd.f32 0.0, %v727
      %v729 = vpop.f32.mrb[0].mxu0
      %730 = vmatprep.mubr.f32.mxu0 0.0
      %731 = vmatmul.mubr.f32.gmra.mrb[0].mxu0 %v601
      %v732 = vpop.f32.mrb[0].mxu0
      %v733 = vadd.f32 0.0, %v732
      %v734 = vpop.f32.mrb[0].mxu0
      %735 = vmatprep.mubr.f32.mxu0 0.0
      %736 = vmatmul.mubr.f32.gmra.mrb[0].mxu0 %v604
      %v737 = vpop.f32.mrb[0].mxu0
      %v738 = vadd.f32 0.0, %v737
      %v739 = vpop.f32.mrb[0].mxu0
      %740 = vmatprep.mubr.f32.mxu0 0.0
      %741 = vmatmul.mubr.f32.gmra.mrb[0].mxu0 %v607
      %v742 = vpop.f32.mrb[0].mxu0
      %v743 = vadd.f32 0.0, %v742
      %v744 = vpop.f32.mrb[0].mxu0
      %745 = vmatprep.mubr.f32.mxu0 0.0
      %746 = vmatmul.mubr.f32.gmra.mrb[0].mxu0 %v610
      %v747 = vpop.f32.mrb[0].mxu0
      %v748 = vadd.f32 0.0, %v747
      %v749 = vpop.f32.mrb[0].mxu0
      %750 = vmatprep.mubr.f32.mxu0 0.0
      %751 = vmatmul.mubr.f32.gmra.mrb[0].mxu0 %v613
      %v752 = vpop.f32.mrb[0].mxu0
      %v753 = vadd.f32 0.0, %v752
      %v754 = vpop.f32.mrb[0].mxu0
      %755 = vmatprep.mubr.f32.mxu0 0.0
      %756 = vmatmul.mubr.f32.gmra.mrb[0].mxu0 %v616
      %v757 = vpop.f32.mrb[0].mxu0
      %v758 = vadd.f32 0.0, %v757
      %v759 = vpop.f32.mrb[0].mxu0
      %760 = vmatprep.mubr.f32.mxu0 0.0
      %761 = vmatmul.mubr.f32.gmra.mrb[0].mxu0 %v619
      %v762 = vpop.f32.mrb[0].mxu0
      %v763 = vadd.f32 0.0, %v762
      %v764 = vpop.f32.mrb[0].mxu0
      %765 = vdwg.mxu0
      %vm766 = vcmask 261120
      %767 = vst.msk [vmem:[%s172] sm:$0xff] %vm766, %v688
      %768 = vst.msk [vmem:[%s172 + $0x8] sm:$0xff] %vm766, %v693
      %769 = vst.msk [vmem:[%s172 + $0x10] sm:$0xff] %vm766, %v698
      %770 = vst.msk [vmem:[%s172 + $0x18] sm:$0xff] %vm766, %v703
      %771 = vst.msk [vmem:[%s172 + $0x20] sm:$0xff] %vm766, %v708
      %772 = vst.msk [vmem:[%s172 + $0x28] sm:$0xff] %vm766, %v713
      %773 = vst.msk [vmem:[%s172 + $0x30] sm:$0xff] %vm766, %v718
      %774 = vst.msk [vmem:[%s172 + $0x38] sm:$0xff] %vm766, %v723
      %775 = vst.msk [vmem:[%s172 + $0x40] sm:$0xff] %vm766, %v728
      %776 = vst.msk [vmem:[%s172 + $0x48] sm:$0xff] %vm766, %v733
      %777 = vst.msk [vmem:[%s172 + $0x50] sm:$0xff] %vm766, %v738
      %778 = vst.msk [vmem:[%s172 + $0x58] sm:$0xff] %vm766, %v743
      %779 = vst.msk [vmem:[%s172 + $0x60] sm:$0xff] %vm766, %v748
      %780 = vst.msk [vmem:[%s172 + $0x68] sm:$0xff] %vm766, %v753
      %781 = vst.msk [vmem:[%s172 + $0x70] sm:$0xff] %vm766, %v758
      %782 = vst.msk [vmem:[%s172 + $0x78] sm:$0xff] %vm766, %v763
      %s783 = smul.u32 16, %s14
      %p784 = scmp.lt.s32.totalorder %s783, 31
      %s785 = scalar_select %p784, %s783, 31
      %s786 = smul.addr %s785, 8
      %s787 = scalar_lea.vmem %s3, %s786
      // Predicated region
      $region33: #{tpu_custom_call.1} parent=31 // pred_check
        %p788 = pneg %p100
      $region34: #{tpu_custom_call.1} parent=31 // pred_check_branch
        %790 = sbr.rel (%p788) target = $region36
      $region35: #{tpu_custom_call.1} parent=31 // pred_region
        %s791 = smul.u32 16, %s14
      $region36: #{tpu_custom_call.1} parent=31 // pred_fallthru
        _
    $region32: #{tpu_custom_call.1} parent=5 // pred_fallthru
      _
    %p792 = scmp.le.s32.totalorder 2, %s9
    // Predicated region
    $region37: #{tpu_custom_call.1} parent=5 // pred_check
      %p793 = pneg %p792
    $region38: #{tpu_custom_call.1} parent=5 // pred_check_branch
      %795 = sbr.rel (%p793) target = $region40
    $region39: #{tpu_custom_call.1} parent=5 // pred_region
      %s796 = ssub.s32 %s9, 2
      // Predicated region
      $region41: #{tpu_custom_call.1} parent=39 // pred_check
        %p797 = pneg %p106
      $region42: #{tpu_custom_call.1} parent=39 // pred_check_branch
        %799 = sbr.rel (%p797) target = $region44
      $region43: #{tpu_custom_call.1} parent=39 // pred_region
        %s800 = smul.u32 16, %s15
        %p801 = scmp.lt.s32.totalorder %s800, 31
        %s802 = scalar_select %p801, %s800, 31
        %s803 = smul.addr %s802, 8
        %s804 = scalar_lea.vmem %s3, %s803
      $region44: #{tpu_custom_call.1} parent=39 // pred_fallthru
        _
    $region40: #{tpu_custom_call.1} parent=5 // pred_fallthru
      _
  $region6: #{tpu_custom_call.1} parent=0 // loop_footer
    %s13 = sadd.s32 1, %s9
  $region7: #{tpu_custom_call.1} parent=0 // loop_footer_branch
    %8 = sbr.rel target = $region3
  $region8: #{tpu_custom_call.1} parent=0 // loop_exit
    _

</llo_original>
